<compile_context>
chip_gen: v5e
topology: v5e:2x2
jax: 0.10.0
libtpu: 0.0.40
codegen_flags: <defaults>
</compile_context>

<pallas_src>
import functools

import numpy as np
import jax
import jax.numpy as jnp
from jax.experimental import pallas as pl
from jax.experimental.pallas import tpu as pltpu


_TILE_ROWS = 512                      # max rows (B*C) per block, multiple of 8
_TARGET_BLOCK_BYTES = 8 * 1024 * 1024 # ~8 MiB of input per grid step
_VMEM_LIMIT_BYTES = 48 * 1024 * 1024  # fits v7x (64 MiB physical) with headroom


def _round_up(x: int, m: int) -> int:
    return ((x + m - 1) // m) * m


def _dropout_nd_kernel(seed_ref, x_ref, o_ref, *, p: float):
    """One (block_rows, block_lanes) tile: out = x * tied_per_row_factor.

    The per-row factor (0 or 1/(1-p)) is a stateless murmur-style hash of the
    *global* row index and the seed, so it is identical for every L tile of a
    row (tied mask) and independent across rows, with no cross-tile state.
    """
    block_rows = x_ref.shape[0]

    # One uniform per global row.
    local = jax.lax.broadcasted_iota(jnp.int32, (block_rows, 1), 0)
    gid = local + pl.program_id(0) * block_rows
    h = gid.astype(jnp.uint32)
    h = h + seed_ref[0].astype(jnp.uint32) * jnp.uint32(0x9E3779B9)
    # murmur3-style avalanche finalizer (uint32, wrapping arithmetic)
    h = h ^ (h >> 16)
    h = h * jnp.uint32(0x85EBCA6B)
    h = h ^ (h >> 13)
    h = h * jnp.uint32(0xC2B2AE35)
    h = h ^ (h >> 16)
    # top 24 bits -> uniform in [0, 1)
    u = (h >> 8).astype(jnp.int32).astype(jnp.float32) * jnp.float32(
        1.0 / (1 << 24))
    keep = u < jnp.float32(1.0 - p)
    factor = jnp.where(keep, jnp.float32(1.0 / (1.0 - p)), jnp.float32(0.0))

    # Broadcast multiply in f32 (single rounding to output dtype).
    o_ref[...] = (x_ref[...].astype(jnp.float32) * factor).astype(o_ref.dtype)


def dropout_nd(x, *, p: float = 0.5, tie: bool = True, transposed: bool = True,
               training: bool = True, seed=0):
    """JAX/Pallas equivalent of DropoutNd.forward.

    x: (batch, dim, lengths...) if transposed=True, else (batch, lengths..., dim).
    Output dtype == input dtype.
    """
    if p < 0 or p >= 1:
        raise ValueError(
            f"dropout probability has to be in [0, 1), but got {p}")
    if not training or p == 0.0:
        return x
    if not tie:
        # TODO(synk): untied (elementwise) dropout mask not implemented; tie=True only.
        raise NotImplementedError("tie=False not implemented in Pallas kernel")

    if not transposed:
        # TODO(synk): add a channel-last-native kernel (per-(batch,channel) factor
        # indexed from row//prod(lengths) and the lane axis) to avoid this transpose copy.
        x = jnp.moveaxis(x, -1, 1)

    orig_shape = x.shape
    orig_dtype = x.dtype
    B, C = int(orig_shape[0]), int(orig_shape[1])
    L = 1
    for d in orig_shape[2:]:
        L *= int(d)
    R = B * C
    if R == 0 or L == 0:
        out = x
        if not transposed:
            out = jnp.moveaxis(out, 1, -1)
        return out

    x2d = x.reshape(R, L)
    itemsize = jnp.dtype(orig_dtype).itemsize

    # Tile sizes: rows capped at 512 (multiple of 8); lanes chosen from a byte
    # budget so each block is ~8 MiB regardless of dtype / row count, rounded
    # to a multiple of 128.  Edge blocks are masked by Pallas (no pad/slice).
    block_rows = min(_TILE_ROWS, _round_up(R, 8))
    lane_budget = (_TARGET_BLOCK_BYTES // (block_rows * itemsize)) // 128 * 128
    block_lanes = max(128, min(int(lane_budget), _round_up(L, 128)))
    # TODO(synk): for L < 128, fold k=ceil(128/L) rows into the lane dim for a
    # lane-dense store instead of masked partial stores.

    grid = (pl.cdiv(R, block_rows), pl.cdiv(L, block_lanes))
    seed_arr = jnp.asarray(seed, dtype=jnp.int32).reshape((1,))

    out2d = pl.pallas_call(
        functools.partial(_dropout_nd_kernel, p=float(p)),
        out_shape=jax.ShapeDtypeStruct((R, L), orig_dtype),
        grid=grid,
        in_specs=[
            pl.BlockSpec(memory_space=pltpu.MemorySpace.SMEM),  # seed scalar
            pl.BlockSpec((block_rows, block_lanes), lambda i, j: (i, j)),
        ],
        out_specs=pl.BlockSpec((block_rows, block_lanes), lambda i, j: (i, j)),
        compiler_params=pltpu.CompilerParams(
            dimension_semantics=("parallel", "parallel"),
            vmem_limit_bytes=_VMEM_LIMIT_BYTES,
        ),
        cost_estimate=pl.CostEstimate(
            flops=R * L,
            transcendentals=0,
            bytes_accessed=2 * R * L * itemsize,
        ),
    )(seed_arr, x2d)

    out = out2d.reshape(orig_shape)
    if not transposed:
        out = jnp.moveaxis(out, 1, -1)
    return out


def _check_tied_and_scaled(y, x, p):
    """Every (b, c) slice must be exactly 0 or exactly x * 1/(1-p)."""
    scale = 1.0 / (1.0 - p)
    yn = np.asarray(y, dtype=np.float32)
    xn = np.asarray(x, dtype=np.float32)
    B, C = x.shape[0], x.shape[1]
    for b in range(B):
        for c in range(C):
            ry = yn[b, c].reshape(-1)
            rx = xn[b, c].reshape(-1)
            zero_row = np.allclose(ry, 0.0)
            scaled_row = np.allclose(ry, rx * scale, rtol=1e-5, atol=1e-5)
            assert zero_row or scaled_row, \
                "dropout mask not tied across lengths / wrong scale"


if __name__ == "__main__":
    key = jax.random.PRNGKey(0)
    p = 0.25

    # Main case: (batch, channel, H, W) = (2, 4, 16, 16) -> rows=8, L=256.
    B, C, H, W = 2, 4, 16, 16
    x = jax.random.normal(key, (B, C, H, W), dtype=jnp.float32)
    y = dropout_nd(x, p=p, tie=True, transposed=True, training=True, seed=42)
    y = jax.block_until_ready(y)
    assert y.shape == x.shape and y.dtype == x.dtype
    _check_tied_and_scaled(y, x, p)

    # Non-tile-multiple shape exercises the masked edge blocks (no pad/slice).
    key2 = jax.random.PRNGKey(1)
    x2 = jax.random.normal(key2, (3, 5, 50), dtype=jnp.float32)
    y2 = jax.block_until_ready(dropout_nd(x2, p=p, training=True, seed=3))
    assert y2.shape == x2.shape and y2.dtype == x2.dtype
    _check_tied_and_scaled(y2, x2, p)

    # Native-dtype path keeps bf16 as bf16 (math done in f32 inside the kernel).
    y_bf16 = jax.block_until_ready(
        dropout_nd(x.astype(jnp.bfloat16), p=p, training=True, seed=7))
    assert y_bf16.dtype == jnp.bfloat16

    # Eval mode is identity.
    y_eval = jax.block_until_ready(dropout_nd(x, p=p, training=False))
    assert np.allclose(np.asarray(y_eval), np.asarray(x))

    print("KERNEL_OK")
</pallas_src>

<mosaic_0001>
module attributes {stable_mosaic.version = 11 : i64} {
  func.func @_dropout_nd_kernel(%arg0: i32, %arg1: i32, %arg2: memref<1xi32, #tpu.memory_space<smem>>, %arg3: memref<8x256xf32, #tpu.memory_space<vmem>>, %arg4: memref<8x256xf32, #tpu.memory_space<vmem>>) attributes {dimension_semantics = [#tpu.dimension_semantics<parallel>, #tpu.dimension_semantics<parallel>], iteration_bounds = array<i64: 1, 1>, scalar_prefetch = 0 : i64, scratch_operands = 0 : i64, tpu.core_type = #tpu.core_type<tc>, window_params = [{transform_indices = @transform_0, window_bounds = array<i64: 1>}, {transform_indices = @transform_1, window_bounds = array<i64: 8, 256>}, {transform_indices = @transform_2, window_bounds = array<i64: 8, 256>}]} {
    %0 = tpu.iota {dimensions = array<i32: 0>} : vector<8x1xi32>
    %c8_i32 = arith.constant 8 : i32
    %1 = arith.muli %arg0, %c8_i32 : i32
    %2 = vector.broadcast %1 : i32 to vector<8x1xi32>
    %3 = arith.addi %0, %2 : vector<8x1xi32>
    %c0 = arith.constant 0 : index
    %4 = memref.load %arg2[%c0] : memref<1xi32, #tpu.memory_space<smem>>
    %c-1640531527_i32 = arith.constant -1640531527 : i32
    %5 = arith.muli %4, %c-1640531527_i32 : i32
    %6 = vector.broadcast %5 : i32 to vector<8x1xi32>
    %7 = arith.addi %3, %6 : vector<8x1xi32>
    %c16_i32 = arith.constant 16 : i32
    %8 = vector.broadcast %c16_i32 : i32 to vector<8x1xi32>
    %9 = arith.shrui %7, %8 : vector<8x1xi32>
    %10 = arith.xori %7, %9 : vector<8x1xi32>
    %c-2048144789_i32 = arith.constant -2048144789 : i32
    %11 = vector.broadcast %c-2048144789_i32 : i32 to vector<8x1xi32>
    %12 = arith.muli %10, %11 : vector<8x1xi32>
    %c13_i32 = arith.constant 13 : i32
    %13 = vector.broadcast %c13_i32 : i32 to vector<8x1xi32>
    %14 = arith.shrui %12, %13 : vector<8x1xi32>
    %15 = arith.xori %12, %14 : vector<8x1xi32>
    %c-1028477387_i32 = arith.constant -1028477387 : i32
    %16 = vector.broadcast %c-1028477387_i32 : i32 to vector<8x1xi32>
    %17 = arith.muli %15, %16 : vector<8x1xi32>
    %c16_i32_0 = arith.constant 16 : i32
    %18 = vector.broadcast %c16_i32_0 : i32 to vector<8x1xi32>
    %19 = arith.shrui %17, %18 : vector<8x1xi32>
    %20 = arith.xori %17, %19 : vector<8x1xi32>
    %c8_i32_1 = arith.constant 8 : i32
    %21 = vector.broadcast %c8_i32_1 : i32 to vector<8x1xi32>
    %22 = arith.shrui %20, %21 : vector<8x1xi32>
    %23 = arith.sitofp %22 : vector<8x1xi32> to vector<8x1xf32>
    %cst = arith.constant 5.96046448E-8 : f32
    %24 = vector.broadcast %cst : f32 to vector<8x1xf32>
    %25 = arith.mulf %23, %24 : vector<8x1xf32>
    %cst_2 = arith.constant 7.500000e-01 : f32
    %26 = vector.broadcast %cst_2 : f32 to vector<8x1xf32>
    %27 = arith.cmpf olt, %25, %26 : vector<8x1xf32>
    %cst_3 = arith.constant 1.33333337 : f32
    %cst_4 = arith.constant 0.000000e+00 : f32
    %28 = vector.broadcast %cst_3 : f32 to vector<8x1xf32>
    %29 = vector.broadcast %cst_4 : f32 to vector<8x1xf32>
    %30 = arith.select %27, %28, %29 : vector<8x1xi1>, vector<8x1xf32>
    %c0_5 = arith.constant 0 : index
    %c0_6 = arith.constant 0 : index
    %31 = vector.load %arg3[%c0_5, %c0_6] : memref<8x256xf32, #tpu.memory_space<vmem>>, vector<8x256xf32>
    %32 = vector.broadcast %30 : vector<8x1xf32> to vector<8x256xf32>
    %33 = arith.mulf %31, %32 : vector<8x256xf32>
    %c0_7 = arith.constant 0 : index
    %c0_8 = arith.constant 0 : index
    %34 = vector.load %arg4[%c0_7, %c0_8] : memref<8x256xf32, #tpu.memory_space<vmem>>, vector<8x256xf32>
    tpu.vector_store %arg4[%c0_7, %c0_8], %33 {strides = array<i32>} : memref<8x256xf32, #tpu.memory_space<vmem>>, vector<8x256xf32>,
    return
  }
  func.func @transform_0(%arg0: i32, %arg1: i32) -> i32 {
    %c0_i32 = arith.constant 0 : i32
    %c0_i32_0 = arith.constant 0 : i32
    return %c0_i32 : i32
  }
  func.func @transform_1(%arg0: i32, %arg1: i32) -> (i32, i32) {
    %c0_i32 = arith.constant 0 : i32
    return %arg0, %arg1 : i32, i32
  }
  func.func @transform_2(%arg0: i32, %arg1: i32) -> (i32, i32) {
    %c0_i32 = arith.constant 0 : i32
    return %arg0, %arg1 : i32, i32
  }
}

</mosaic_0001>

<llo_original>
// kernel: tpu_custom_call.1
$region0: #{tpu_custom_call.1}
  #allocation0 [shape = 'u32[]', space=smem, size = 0x4, offset = 0x4, fixed_abs, tag = 'smem constant byte address 0x4 - core index']
  #allocation1 [shape = 'u32[72,128]{1,0:T(1,128)}', space=vmem, size = 0x9000, scoped, tag = 'internal scratch']
  #allocation2 [shape = 's32[1]{0:T(128)S(6)}', space=smem, size = 0x200, scoped, tag = 'scoped memory for tpu_custom_call.1']
  %s0 = inlined_call_operand.<no memory space> [shape: s32[1], index: 0, kind: input, shape index: {}]
  %s1 = inlined_call_operand.hbm [shape: f32[8,256], index: 1, kind: input, shape index: {}]
  %s2 = inlined_call_operand.hbm [shape: f32[8,256], index: 2, kind: output, shape index: {}]
  %s3 = sld [smem:[#allocation0]]
  $region22: #{tpu_custom_call.1} parent=0
    _
  %s5 = ssub.s32 1, %s3
  %s6 = scalar_select 0, %s5, %s3
  %7 = sst [smem:[#allocation2]] %s0
  $region1: #{tpu_custom_call.1} parent=0
    #allocation3 [shape = 'u8[8192]{0}', space=vmem, size = 0x2000, scoped, tag = 'input window, operand 1, single buffered']
    #allocation4 [shape = 's32[1]{0}', space=sflag, size = 0x4, scoped, tag = 'scoped memory for tpu_custom_call.1']
    #allocation5 [shape = 's32[1]{0}', space=sflag, size = 0x4, scoped, tag = 'scoped memory for tpu_custom_call.1']
    #allocation6 [shape = 'u8[8192]{0}', space=vmem, size = 0x2000, scoped, tag = 'output window, operand 0, single buffered']
    %8 = vsyncpa [#allocation4], 0
    %9 = vsyncpa [#allocation5], 0
    // Predicated region
    $region2: #{tpu_custom_call.1} parent=1 // pred_check
      _
    $region3: #{tpu_custom_call.1} parent=1 // pred_check_branch
      %11 = sbr.rel (0) target = $region5
    $region4: #{tpu_custom_call.1} parent=1 // pred_region
      _
    $region5: #{tpu_custom_call.1} parent=1 // pred_fallthru
      _
    // Predicated region
    $region6: #{tpu_custom_call.1} parent=1 // pred_check
      _
    $region7: #{tpu_custom_call.1} parent=1 // pred_check_branch
      %13 = sbr.rel (0) target = $region9
    $region8: #{tpu_custom_call.1} parent=1 // pred_region
      %15 = vsyncadd [#allocation4], 0
      %s17 = sshll.u32 %s1, 4
      %s18 = int_to_ptr.hbm [resolvable:$true] %s17
      %s19 = sshll.u32 [#allocation3], 4
      %s20 = int_to_ptr.vmem [resolvable:$true] %s19
      %22 = dma.hbm_to_vmem [thread:$0]  %s18, 256, %s20, [#allocation4]
    $region9: #{tpu_custom_call.1} parent=1 // pred_fallthru
      _
    // Predicated region
    $region10: #{tpu_custom_call.1} parent=1 // pred_check
      _
    $region11: #{tpu_custom_call.1} parent=1 // pred_check_branch
      %24 = sbr.rel (0) target = $region13
    $region12: #{tpu_custom_call.1} parent=1 // pred_region
      %26 = dma.done [#allocation4], 256
    $region13: #{tpu_custom_call.1} parent=1 // pred_fallthru
      _
    %v27 = vlaneseq
    %v28 = vshrl.u32 %v27, 7
    %s29 = smul.u32 0, 8
    %v30 = vstv %s29
    %v31 = vadd.s32 %v28, %v30
    %s32 = sld [smem:[#allocation2]]
    %s33 = smul.u32 %s32, 2654435769
    %v34 = vstv %s33
    %v35 = vadd.s32 %v31, %v34
    %v36 = vshrl.u32 %v35, 16
    %v37 = vxor.u32 %v35, %v36
    %v38 = vmul.u32 %v37, 2246822507
    %v39 = vshrl.u32 %v38, 13
    %v40 = vxor.u32 %v38, %v39
    %v41 = vmul.u32 %v40, 3266489909
    %v42 = vshrl.u32 %v41, 16
    %v43 = vxor.u32 %v41, %v42
    %v44 = vshrl.u32 %v43, 8
    %v45 = vcvt.s32.f32 %v44
    %v46 = vmul.f32 %v45, 5.9604645e-08
    %vm47 = vcmp.lt.f32.partialorder %v46, 0.75
    %v48 = vsel %vm47, 1.3333334, 0.0
    %v49 = vld [vmem:[#allocation3] sm:$0xff]
    %v50 = vld [vmem:[#allocation3 + $0x8] sm:$0xff]
    %v51 = vmul.f32 %v49, %v48
    %v52 = vmul.f32 %v50, %v48
    %53 = vst [vmem:[#allocation6] sm:$0xff] %v51
    %54 = vst [vmem:[#allocation6 + $0x8] sm:$0xff] %v52
    // Predicated region
    $region14: #{tpu_custom_call.1} parent=1 // pred_check
      _
    $region15: #{tpu_custom_call.1} parent=1 // pred_check_branch
      %56 = sbr.rel (0) target = $region17
    $region16: #{tpu_custom_call.1} parent=1 // pred_region
      %58 = vsyncadd [#allocation5], 0
      %s60 = sshll.u32 [#allocation6], 4
      %s61 = int_to_ptr.vmem [resolvable:$true] %s60
      %s62 = sshll.u32 %s2, 4
      %s63 = int_to_ptr.hbm [resolvable:$true] %s62
      %65 = dma.vmem_to_hbm [thread:$0]  %s61, 256, %s63, [#allocation5]
    $region17: #{tpu_custom_call.1} parent=1 // pred_fallthru
      _
    // Predicated region
    $region18: #{tpu_custom_call.1} parent=1 // pred_check
      _
    $region19: #{tpu_custom_call.1} parent=1 // pred_check_branch
      %67 = sbr.rel (0) target = $region21
    $region20: #{tpu_custom_call.1} parent=1 // pred_region
      %69 = dma.done [#allocation5], 256
    $region21: #{tpu_custom_call.1} parent=1 // pred_fallthru
      _
    %70 = vsyncpa [#allocation4], 1
    %71 = vsyncpa [#allocation5], 1

</llo_original>
